<compile_context>
chip_gen: v7x
topology: tpu7x:2x2x1
jax: 0.10.0
libtpu: 0.0.40
codegen_flags: <defaults>
</compile_context>

<pallas_src>
import functools

import jax
import jax.numpy as jnp
from jax.experimental import pallas as pl
from jax.experimental.pallas import tpu as pltpu


_VMEM_LIMIT_BYTES = 48 * 1024 * 1024   # safe on v7x (64 MiB/TC); v5e/v6e could raise
_VMEM_BUDGET_BYTES = 40 * 1024 * 1024  # target for the double-buffered block footprint


def _round_up(x, m):
    return (x + m - 1) // m * m


def _pick_cout_tile(cout):
    """Cout per grid step. Full Cout when small; else a 128/256-wide tile."""
    if cout <= 256:
        return cout
    for tc in (256, 128, 64, 32, 16, 8):
        if cout % tc == 0:
            return tc
    return cout


def _pick_row_tile(hout, wout, cin, cout_tile, in_itemsize):
    """Output rows per grid step.

    TH must divide Hout, keep the blocks' last dim (TH*Wout) 128-lane aligned
    (or equal to the full Hout*Wout extent), and keep the double-buffered
    input/output blocks within the VMEM budget.
    """
    cands = [t for t in range(1, hout + 1)
             if hout % t == 0 and ((t * wout) % 128 == 0 or t == hout)]

    def footprint(th):
        lanes = _round_up(th * wout, 128)
        k_sub = _round_up(9 * cin, 8)
        co_sub = _round_up(cout_tile, 8)
        slab = 2 * k_sub * lanes * in_itemsize          # input block, double-buffered
        outb = 2 * co_sub * lanes * 4                   # f32 output block, double-buffered
        wts = 2 * co_sub * _round_up(9 * cin, 128) * in_itemsize
        return slab + outb + wts

    fitting = [t for t in cands if footprint(t) <= _VMEM_BUDGET_BYTES]
    if fitting:
        return max(fitting)
    return min(cands)   # smallest legal block; only hit at extreme shapes


# ----------------------------- Pallas kernel ------------------------------ #
def _conv_block_kernel(x_ref, w_ref, b_ref, o_ref):
    """One fat MXU matmul per grid step.

    x_ref: (1, 1, 9*Cin, TH*Wout)  packed conv taps (K on sublanes, lane-dense)
    w_ref: (TC, 9*Cin)             packed weights for this Cout tile
    b_ref: (TC, 1)                 bias (f32)
    o_ref: (1, TC, TH*Wout)        lane-dense output slab (f32, flattened HW)
    """
    acc = jnp.dot(w_ref[...], x_ref[0, 0], preferred_element_type=jnp.float32)
    o_ref[0] = jnp.maximum(acc + b_ref[...], 0.0).astype(o_ref.dtype)


# ------------------------------ Wrapper ------------------------------------ #
@functools.partial(jax.jit, static_argnames=("use_bf16",))
def conv_half_size_double_channels(x_nchw, weight_oihw, bias, *, use_bf16=True):
    """Forward of ConvHalfSizeDoubleChannels: Conv2d(Cin, 2*Cin, 3, 2, 1) + ReLU.

    x_nchw:      (N, Cin, H, W)      float32
    weight_oihw: (Cout, Cin, 3, 3)   float32 (PyTorch OIHW), Cout = 2*Cin
    bias:        (Cout,)             float32
    returns:     (N, Cout, Hout, Wout) float32 (NCHW), Hout = ceil(H/2).
    """
    n, cin, h, w = x_nchw.shape
    cout = weight_oihw.shape[0]
    hout = (h + 1) // 2
    wout = (w + 1) // 2

    in_dtype = jnp.bfloat16 if use_bf16 else jnp.float32

    x = x_nchw.astype(jnp.float32)
    wgt = weight_oihw.astype(jnp.float32)
    b = bias.astype(jnp.float32)

    # ---- glue: pack all 9 conv taps into channels (stride-2 aware) ---------
    # The conv only touches padded rows/cols [0, 2*Hout] / [0, 2*Wout].
    xp = jnp.pad(x, ((0, 0), (0, 0), (1, 2 * hout - h), (1, 2 * wout - w)))
    taps = []
    for kh in range(3):
        for kw in range(3):
            taps.append(xp[:, :, kh:kh + 2 * hout:2, kw:kw + 2 * wout:2])
    # channel index = (kh*3 + kw)*Cin + ci
    xim = jnp.stack(taps, axis=1).reshape(n, 9 * cin, hout, wout)

    tc = _pick_cout_tile(cout)
    th = _pick_row_tile(hout, wout, cin, tc, jnp.dtype(in_dtype).itemsize)

    # (N, 9Cin, Hout, Wout) -> (N, Hout/TH, 9Cin, TH*Wout): the kernel's matmul
    # RHS is then already K-on-sublanes / lane-dense with no in-kernel relayout.
    xim = xim.reshape(n, 9 * cin, hout // th, th, wout)
    xim = jnp.transpose(xim, (0, 2, 1, 3, 4)).reshape(
        n, hout // th, 9 * cin, th * wout).astype(in_dtype)

    # weights: (Cout, Cin, 3, 3) -> (Cout, 9*Cin), tap order kh-major, kw, ci.
    wmat = jnp.transpose(wgt, (0, 2, 3, 1)).reshape(cout, 9 * cin).astype(in_dtype)
    b2 = b.reshape(cout, 1)

    grid = (n, hout // th, cout // tc)   # Cout innermost: slab block not re-fetched

    out_flat = pl.pallas_call(
        _conv_block_kernel,
        out_shape=jax.ShapeDtypeStruct((n, cout, hout * wout), jnp.float32),
        grid_spec=pltpu.PrefetchScalarGridSpec(
            num_scalar_prefetch=0,
            grid=grid,
            in_specs=[
                pl.BlockSpec((1, 1, 9 * cin, th * wout),
                             lambda ni, hb, co: (ni, hb, 0, 0)),
                pl.BlockSpec((tc, 9 * cin), lambda ni, hb, co: (co, 0)),
                pl.BlockSpec((tc, 1), lambda ni, hb, co: (co, 0)),
            ],
            out_specs=pl.BlockSpec((1, tc, th * wout),
                                   lambda ni, hb, co: (ni, co, hb)),
        ),
        compiler_params=pltpu.CompilerParams(
            dimension_semantics=("parallel", "parallel", "parallel"),
            vmem_limit_bytes=_VMEM_LIMIT_BYTES,
        ),
    )(xim, wmat, b2)

    # Free metadata reshape back to NCHW.
    return out_flat.reshape(n, cout, hout, wout)


# ------------------------------- Main --------------------------------------- #
if __name__ == "__main__":
    key = jax.random.PRNGKey(0)
    k_x, k_w, k_b = jax.random.split(key, 3)

    N, Cin, H, W = 2, 4, 16, 16
    Cout = 2 * Cin

    x = jax.random.normal(k_x, (N, Cin, H, W), dtype=jnp.float32)
    # Deterministic synthetic parameters (shapes follow nn.Conv2d(Cin, 2*Cin, 3, 2, 1))
    fan_in = Cin * 3 * 3
    bound = 1.0 / float(fan_in) ** 0.5
    weight = jax.random.uniform(k_w, (Cout, Cin, 3, 3), minval=-bound, maxval=bound,
                                dtype=jnp.float32)
    bias = jax.random.uniform(k_b, (Cout,), minval=-bound, maxval=bound,
                              dtype=jnp.float32)

    # Reference: XLA conv (same semantics as torch.nn.Conv2d(3,2,1) + ReLU).
    ref = jax.lax.conv_general_dilated(
        x, weight, window_strides=(2, 2), padding=((1, 1), (1, 1)),
        dimension_numbers=("NCHW", "OIHW", "NCHW"))
    ref = jnp.maximum(ref + bias[None, :, None, None], 0.0)

    # f32 path: tight parity with the f32 reference.
    out_f32 = jax.block_until_ready(
        conv_half_size_double_channels(x, weight, bias, use_bf16=False))
    assert out_f32.shape == (N, Cout, (H + 1) // 2, (W + 1) // 2), out_f32.shape
    assert jnp.allclose(out_f32, ref, atol=1e-5, rtol=1e-5), \
        float(jnp.max(jnp.abs(out_f32 - ref)))

    # bf16-input / f32-accumulate MXU path (default; v6e/v7x throughput).
    out_bf16 = jax.block_until_ready(
        conv_half_size_double_channels(x, weight, bias, use_bf16=True))
    assert out_bf16.shape == out_f32.shape, out_bf16.shape
    assert jnp.allclose(out_bf16, ref, atol=5e-2, rtol=5e-2), \
        float(jnp.max(jnp.abs(out_bf16 - ref)))

    print("KERNEL_OK")
</pallas_src>

<mosaic_0001>
module attributes {stable_mosaic.version = 11 : i64} {
  func.func @_conv_block_kernel(%arg0: i32, %arg1: i32, %arg2: i32, %arg3: memref<1x1x36x64xf32, #tpu.memory_space<vmem>>, %arg4: memref<8x36xf32, #tpu.memory_space<vmem>>, %arg5: memref<8x1xf32, #tpu.memory_space<vmem>>, %arg6: memref<1x8x64xf32, #tpu.memory_space<vmem>>) attributes {dimension_semantics = [#tpu.dimension_semantics<parallel>, #tpu.dimension_semantics<parallel>, #tpu.dimension_semantics<parallel>], iteration_bounds = array<i64: 2, 1, 1>, scalar_prefetch = 0 : i64, scratch_operands = 0 : i64, tpu.core_type = #tpu.core_type<tc>, window_params = [{transform_indices = @transform_0, window_bounds = array<i64: 1, 1, 36, 64>}, {transform_indices = @transform_1, window_bounds = array<i64: 8, 36>}, {transform_indices = @transform_2, window_bounds = array<i64: 8, 1>}, {transform_indices = @transform_3, window_bounds = array<i64: 1, 8, 64>}]} {
    %c0 = arith.constant 0 : index
    %c0_0 = arith.constant 0 : index
    %0 = vector.load %arg4[%c0, %c0_0] : memref<8x36xf32, #tpu.memory_space<vmem>>, vector<8x36xf32>
    %c0_1 = arith.constant 0 : index
    %c0_2 = arith.constant 0 : index
    %c0_3 = arith.constant 0 : index
    %c0_4 = arith.constant 0 : index
    %1 = vector.load %arg3[%c0_1, %c0_2, %c0_3, %c0_4] : memref<1x1x36x64xf32, #tpu.memory_space<vmem>>, vector<1x1x36x64xf32>
    %2 = vector.shape_cast %1 : vector<1x1x36x64xf32> to vector<36x64xf32>
    %cst = arith.constant dense<0.000000e+00> : vector<8x64xf32>
    %3 = tpu.matmul %0, %2, %cst {dimension_numbers = #tpu.dot_dimension_numbers<[1], [0], [0], [1], [0, 0, 1, 1], [], []>} : vector<8x36xf32>, vector<36x64xf32>, vector<8x64xf32> -> vector<8x64xf32>
    %c0_5 = arith.constant 0 : index
    %c0_6 = arith.constant 0 : index
    %4 = vector.load %arg5[%c0_5, %c0_6] : memref<8x1xf32, #tpu.memory_space<vmem>>, vector<8x1xf32>
    %5 = vector.broadcast %4 : vector<8x1xf32> to vector<8x64xf32>
    %6 = arith.addf %3, %5 : vector<8x64xf32>
    %cst_7 = arith.constant 0.000000e+00 : f32
    %7 = vector.broadcast %cst_7 : f32 to vector<8x64xf32>
    %8 = arith.maximumf %6, %7 : vector<8x64xf32>
    %c0_8 = arith.constant 0 : index
    %c0_9 = arith.constant 0 : index
    %c0_10 = arith.constant 0 : index
    %9 = vector.load %arg6[%c0_8, %c0_9, %c0_10] : memref<1x8x64xf32, #tpu.memory_space<vmem>>, vector<1x8x64xf32>
    %10 = vector.shape_cast %9 : vector<1x8x64xf32> to vector<8x64xf32>
    %11 = vector.shape_cast %8 : vector<8x64xf32> to vector<1x8x64xf32>
    tpu.vector_store %arg6[%c0_8, %c0_9, %c0_10], %11 {strides = array<i32>} : memref<1x8x64xf32, #tpu.memory_space<vmem>>, vector<1x8x64xf32>,
    return
  }
  func.func @transform_0(%arg0: i32, %arg1: i32, %arg2: i32) -> (i32, i32, i32, i32) {
    %c0_i32 = arith.constant 0 : i32
    %c0_i32_0 = arith.constant 0 : i32
    %c0_i32_1 = arith.constant 0 : i32
    return %arg0, %arg1, %c0_i32, %c0_i32_0 : i32, i32, i32, i32
  }
  func.func @transform_1(%arg0: i32, %arg1: i32, %arg2: i32) -> (i32, i32) {
    %c0_i32 = arith.constant 0 : i32
    %c0_i32_0 = arith.constant 0 : i32
    return %arg2, %c0_i32 : i32, i32
  }
  func.func @transform_2(%arg0: i32, %arg1: i32, %arg2: i32) -> (i32, i32) {
    %c0_i32 = arith.constant 0 : i32
    %c0_i32_0 = arith.constant 0 : i32
    return %arg2, %c0_i32 : i32, i32
  }
  func.func @transform_3(%arg0: i32, %arg1: i32, %arg2: i32) -> (i32, i32, i32) {
    %c0_i32 = arith.constant 0 : i32
    return %arg0, %arg2, %arg1 : i32, i32, i32
  }
}

</mosaic_0001>

<llo_original>
// kernel: conv_half_size_double_channels.1
$region0: #{conv_half_size_double_channels.1}
  #allocation0 [shape = 'u32[]', space=smem, size = 0x4, offset = 0x4, fixed_abs, tag = 'smem constant byte address 0x4 - core index']
  #allocation1 [shape = 'u32[144,128]{1,0:T(1,128)}', space=vmem, size = 0x12000, scoped, tag = 'internal scratch']
  %s0 = inlined_call_operand.vmem [shape: f32[2,1,36,64], index: 0, kind: input, shape index: {}]
  %s1 = inlined_call_operand.vmem [shape: f32[8,36], index: 1, kind: input, shape index: {}]
  %s2 = inlined_call_operand.vmem [shape: f32[8,1], index: 2, kind: input, shape index: {}]
  %s3 = inlined_call_operand.vmem [shape: f32[2,8,64], index: 3, kind: output, shape index: {}]
  %s4 = sld [smem:[#allocation0]]
  $region45: #{conv_half_size_double_channels.1} parent=0
    _
  %s6 = ssub.s32 1, %s4
  %s7 = scalar_select 0, %s6, %s4
  loop: start=0, step=1, limit=4
  $region2: #{conv_half_size_double_channels.1} parent=0 // loop_pre_header
    _
  $region3: #{conv_half_size_double_channels.1} parent=0 // loop_header
    %s9 = sphi 0, %s13
    %p10 = scmp.ge.s32.totalorder %s9, 4
    %s16 = sphi 0, %s35
    %s17 = sphi 0, %s31
    %s18 = sphi 0, %s27
    %s19 = sphi 0, %s16
    %s20 = sphi 0, %s17
    %s21 = sphi 0, %s18
    %s22 = sphi 0, %s19
    %s23 = sphi 0, %s20
    %s24 = sphi 0, %s21
    %s40 = sphi 0, %s42
    %s43 = sphi 0, %s40
    %s44 = sphi 0, %s43
    %s60 = sphi 0, %s44
    %s66 = sphi 0, %s68
    %s69 = sphi 0, %s66
    %s70 = sphi 0, %s69
    %s86 = sphi 0, %s70
    %s92 = sphi 0, %s94
    %s95 = sphi 0, %s92
    %s96 = sphi 0, %s95
    %s112 = sphi 0, %s96
    %s122 = sphi 0, %s124
    %s125 = sphi 0, %s122
    %s126 = sphi 0, %s125
    %s142 = sphi 0, %s126
  $region4: #{conv_half_size_double_channels.1} parent=0 // loop_header_branch
    %12 = sbr.rel (%p10) target = $region8
  $region5: #{conv_half_size_double_channels.1} parent=0 // loop_body
    %s14 = ssub.s32 %s9, 1
    %s15 = ssub.s32 %s9, 2
    %s25 = sadd.s32 1, %s18
    %p26 = scmp.ge.s32.totalorder %s25, 1
    %s27 = scalar_select %p26, 0, %s25
    %s28 = sadd.s32 1, %s17
    %s29 = scalar_select %p26, %s28, %s17
    %p30 = scmp.ge.s32.totalorder %s29, 1
    %s31 = scalar_select %p30, 0, %s29
    %s32 = sadd.s32 1, %s16
    %s33 = scalar_select %p30, %s32, %s16
    %p34 = scmp.ge.s32.totalorder %s33, 2
    %s35 = scalar_select %p34, 0, %s33
    %s36 = ssub.s32 %s16, %s35
    %s37 = ssub.s32 %s17, %s31
    %s38 = sor.u32 %s36, %s37
    %p39 = scmp.eq.s32.totalorder %s38, 0
    %s41 = sadd.s32 %s40, 1
    %s42 = scalar_select %p39, %s40, %s41
    %p45 = pneg %p39
    %p46 = scmp.eq.s32.totalorder %s9, 1
    %p47 = por %p45, %p46
    %p48 = scmp.ne.s32.totalorder %s40, %s43
    %p49 = scmp.eq.s32.totalorder %s9, 0
    %p50 = por %p48, %p49
    %p51 = scmp.ne.s32.totalorder %s40, %s43
    %p52 = scmp.eq.s32.totalorder %s14, 1
    %p53 = por %p51, %p52
    %p54 = scmp.ne.s32.totalorder %s43, %s44
    %p55 = scmp.eq.s32.totalorder %s14, 0
    %p56 = por %p54, %p55
    %p57 = scmp.ne.s32.totalorder %s43, %s44
    %p58 = scmp.eq.s32.totalorder %s15, 1
    %p59 = por %p57, %p58
    %p61 = scmp.ne.s32.totalorder %s44, %s60
    %p62 = scmp.eq.s32.totalorder %s15, 0
    %p63 = por %p61, %p62
    %s64 = ssub.s32 %s18, %s27
    %p65 = scmp.eq.s32.totalorder %s64, 0
    %s67 = sadd.s32 %s66, 1
    %s68 = scalar_select %p65, %s66, %s67
    %p71 = pneg %p65
    %p72 = scmp.eq.s32.totalorder %s9, 1
    %p73 = por %p71, %p72
    %p74 = scmp.ne.s32.totalorder %s66, %s69
    %p75 = scmp.eq.s32.totalorder %s9, 0
    %p76 = por %p74, %p75
    %p77 = scmp.ne.s32.totalorder %s66, %s69
    %p78 = scmp.eq.s32.totalorder %s14, 1
    %p79 = por %p77, %p78
    %p80 = scmp.ne.s32.totalorder %s69, %s70
    %p81 = scmp.eq.s32.totalorder %s14, 0
    %p82 = por %p80, %p81
    %p83 = scmp.ne.s32.totalorder %s69, %s70
    %p84 = scmp.eq.s32.totalorder %s15, 1
    %p85 = por %p83, %p84
    %p87 = scmp.ne.s32.totalorder %s70, %s86
    %p88 = scmp.eq.s32.totalorder %s15, 0
    %p89 = por %p87, %p88
    %s90 = ssub.s32 %s18, %s27
    %p91 = scmp.eq.s32.totalorder %s90, 0
    %s93 = sadd.s32 %s92, 1
    %s94 = scalar_select %p91, %s92, %s93
    %p97 = pneg %p91
    %p98 = scmp.eq.s32.totalorder %s9, 1
    %p99 = por %p97, %p98
    %p100 = scmp.ne.s32.totalorder %s92, %s95
    %p101 = scmp.eq.s32.totalorder %s9, 0
    %p102 = por %p100, %p101
    %p103 = scmp.ne.s32.totalorder %s92, %s95
    %p104 = scmp.eq.s32.totalorder %s14, 1
    %p105 = por %p103, %p104
    %p106 = scmp.ne.s32.totalorder %s95, %s96
    %p107 = scmp.eq.s32.totalorder %s14, 0
    %p108 = por %p106, %p107
    %p109 = scmp.ne.s32.totalorder %s95, %s96
    %p110 = scmp.eq.s32.totalorder %s15, 1
    %p111 = por %p109, %p110
    %p113 = scmp.ne.s32.totalorder %s96, %s112
    %p114 = scmp.eq.s32.totalorder %s15, 0
    %p115 = por %p113, %p114
    %s116 = ssub.s32 %s16, %s35
    %s117 = ssub.s32 %s18, %s27
    %s118 = sor.u32 %s116, %s117
    %s119 = ssub.s32 %s17, %s31
    %s120 = sor.u32 %s118, %s119
    %p121 = scmp.eq.s32.totalorder %s120, 0
    %s123 = sadd.s32 %s122, 1
    %s124 = scalar_select %p121, %s122, %s123
    %p127 = pneg %p121
    %p128 = scmp.eq.s32.totalorder %s9, 1
    %p129 = por %p127, %p128
    %p130 = scmp.ne.s32.totalorder %s122, %s125
    %p131 = scmp.eq.s32.totalorder %s9, 0
    %p132 = por %p130, %p131
    %p133 = scmp.ne.s32.totalorder %s122, %s125
    %p134 = scmp.eq.s32.totalorder %s14, 1
    %p135 = por %p133, %p134
    %p136 = scmp.ne.s32.totalorder %s125, %s126
    %p137 = scmp.eq.s32.totalorder %s14, 0
    %p138 = por %p136, %p137
    %p139 = scmp.ne.s32.totalorder %s125, %s126
    %p140 = scmp.eq.s32.totalorder %s15, 1
    %p141 = por %p139, %p140
    %p143 = scmp.ne.s32.totalorder %s126, %s142
    %p144 = scmp.eq.s32.totalorder %s15, 0
    %p145 = por %p143, %p144
    %p146 = scmp.le.s32.totalorder 1, %s9
    %p147 = scmp.lt.s32.totalorder %s9, 3
    %p148 = pnand %p146, %p147
    %p149 = pneg %p148
    // Predicated region
    $region9: #{conv_half_size_double_channels.1} parent=5 // pred_check
      _
    $region10: #{conv_half_size_double_channels.1} parent=5 // pred_check_branch
      %151 = sbr.rel (%p148) target = $region12
    $region11: #{conv_half_size_double_channels.1} parent=5 // pred_region
      %s152 = ssub.s32 %s9, 1
      // Predicated region
      $region13: #{conv_half_size_double_channels.1} parent=11 // pred_check
        %p153 = pneg %p82
      $region14: #{conv_half_size_double_channels.1} parent=11 // pred_check_branch
        %155 = sbr.rel (%p153) target = $region16
      $region15: #{conv_half_size_double_channels.1} parent=11 // pred_region
        %p156 = scmp.lt.s32.totalorder %s21, 0
        %s157 = scalar_select %p156, %s21, 0
        %s158 = smul.addr %s157, 8
        %s159 = scalar_lea.vmem %s1, %s158
      $region16: #{conv_half_size_double_channels.1} parent=11 // pred_fallthru
        _
      // Predicated region
      $region17: #{conv_half_size_double_channels.1} parent=11 // pred_check
        %p160 = pneg %p108
      $region18: #{conv_half_size_double_channels.1} parent=11 // pred_check_branch
        %162 = sbr.rel (%p160) target = $region20
      $region19: #{conv_half_size_double_channels.1} parent=11 // pred_region
        %p163 = scmp.lt.s32.totalorder %s21, 0
        %s164 = scalar_select %p163, %s21, 0
        %s165 = smul.addr %s164, 8
        %s166 = scalar_lea.vmem %s2, %s165
      $region20: #{conv_half_size_double_channels.1} parent=11 // pred_fallthru
        _
    $region12: #{conv_half_size_double_channels.1} parent=5 // pred_fallthru
      _
    %p167 = scmp.lt.s32.totalorder %s9, 2
    // Predicated region
    $region21: #{conv_half_size_double_channels.1} parent=5 // pred_check
      %p168 = pneg %p167
    $region22: #{conv_half_size_double_channels.1} parent=5 // pred_check_branch
      %170 = sbr.rel (%p168) target = $region24
    $region23: #{conv_half_size_double_channels.1} parent=5 // pred_region
      // Predicated region
      $region25: #{conv_half_size_double_channels.1} parent=23 // pred_check
        %p171 = pneg %p50
      $region26: #{conv_half_size_double_channels.1} parent=23 // pred_check_branch
        %173 = sbr.rel (%p171) target = $region28
      $region27: #{conv_half_size_double_channels.1} parent=23 // pred_region
        %p174 = scmp.lt.s32.totalorder %s16, 1
        %s175 = scalar_select %p174, %s16, 1
        %p176 = scmp.lt.s32.totalorder %s17, 0
        %s177 = scalar_select %p176, %s17, 0
        %s178 = smul.addr %s177, 5
        %s179 = smul.addr %s175, 5
        %s180 = sadd.s32 %s178, %s179
        %s181 = smul.addr %s180, 8
        %s182 = scalar_lea.vmem %s0, %s181
      $region28: #{conv_half_size_double_channels.1} parent=23 // pred_fallthru
        _
    $region24: #{conv_half_size_double_channels.1} parent=5 // pred_fallthru
      _
    %p183 = scmp.le.s32.totalorder 1, %s9
    %p184 = scmp.lt.s32.totalorder %s9, 3
    %p185 = pnand %p183, %p184
    %p186 = pneg %p185
    // Predicated region
    $region29: #{conv_half_size_double_channels.1} parent=5 // pred_check
      _
    $region30: #{conv_half_size_double_channels.1} parent=5 // pred_check_branch
      %188 = sbr.rel (%p185) target = $region32
    $region31: #{conv_half_size_double_channels.1} parent=5 // pred_region
      %s189 = ssub.s32 %s9, 1
      %p190 = scmp.lt.s32.totalorder %s19, 1
      %s191 = scalar_select %p190, %s19, 1
      %p192 = scmp.lt.s32.totalorder %s20, 0
      %s193 = scalar_select %p192, %s20, 0
      %s194 = smul.addr %s193, 5
      %s195 = smul.addr %s191, 5
      %s196 = sadd.s32 %s194, %s195
      %s197 = smul.addr %s196, 8
      %s198 = scalar_lea.vmem %s0, %s197
      %p199 = pneg %p56
      %p200 = pneg %p53
      %p201 = scmp.lt.s32.totalorder %s21, 0
      %s202 = scalar_select %p201, %s21, 0
      %s203 = smul.addr %s202, 8
      %s204 = scalar_lea.vmem %s1, %s203
      %p205 = pneg %p82
      %p206 = pneg %p79
      %p207 = scmp.lt.s32.totalorder %s21, 0
      %s208 = scalar_select %p207, %s21, 0
      %s209 = smul.addr %s208, 8
      %s210 = scalar_lea.vmem %s2, %s209
      %p211 = pneg %p108
      %p212 = pneg %p105
      %p213 = pneg %p138
      %p214 = pneg %p135
      %p215 = scmp.lt.s32.totalorder %s19, 1
      %s216 = scalar_select %p215, %s19, 1
      %p217 = scmp.lt.s32.totalorder %s21, 0
      %s218 = scalar_select %p217, %s21, 0
      %p219 = scmp.lt.s32.totalorder %s20, 0
      %s220 = scalar_select %p219, %s20, 0
      %s221 = sadd.s32 %s220, %s218
      %s222 = sadd.s32 %s221, %s216
      %s223 = smul.addr %s222, 8
      %s224 = scalar_lea.vmem %s3, %s223
      %p225 = scmp.lt.s32.totalorder %s19, 1
      %s226 = scalar_select %p225, %s19, 1
      %p227 = scmp.lt.s32.totalorder %s20, 0
      %s228 = scalar_select %p227, %s20, 0
      %s229 = smul.addr %s228, 5
      %s230 = smul.addr %s226, 5
      %s231 = sadd.s32 %s229, %s230
      %s232 = smul.addr %s231, 8
      %s233 = scalar_lea.vmem %s0, %s232
      %p234 = scmp.lt.s32.totalorder %s21, 0
      %s235 = scalar_select %p234, %s21, 0
      %s236 = smul.addr %s235, 8
      %s237 = scalar_lea.vmem %s1, %s236
      %p238 = scmp.lt.s32.totalorder %s21, 0
      %s239 = scalar_select %p238, %s21, 0
      %s240 = smul.addr %s239, 8
      %s241 = scalar_lea.vmem %s2, %s240
      %p242 = scmp.lt.s32.totalorder %s19, 1
      %s243 = scalar_select %p242, %s19, 1
      %p244 = scmp.lt.s32.totalorder %s21, 0
      %s245 = scalar_select %p244, %s21, 0
      %p246 = scmp.lt.s32.totalorder %s20, 0
      %s247 = scalar_select %p246, %s20, 0
      %s248 = sadd.s32 %s247, %s245
      %s249 = sadd.s32 %s248, %s243
      %s250 = smul.addr %s249, 8
      %s251 = scalar_lea.vmem %s3, %s250
      %v252 = vld [vmem:[%s237] sm:$0xff]
      %v253 = vld [vmem:[%s233] sm:$0xff]
      %v254 = vld [vmem:[%s233 + $0x8] sm:$0xff]
      %v255 = vld [vmem:[%s233 + $0x10] sm:$0xff]
      %v256 = vld [vmem:[%s233 + $0x18] sm:$0xff]
      %v257 = vld [vmem:[%s233 + $0x20] sm:$0xf]
      %v258 = vld [vmem:[%s241] sm:$0xff]
      %260 = vset.pattern.permute.xlu0 0
      %261 = vperm.xlu0 %260, %v258
      %v262 = vpop.permute.xlu0 %261
      %vm264 = vcmask 293888
      %v266 = vsel %vm264, %v252, 0
      %vm268 = vcmask 1043456
      %v270 = vsel %vm268, %v257, 0
      %272 = vmatprep.subr.mxu0 0.0
      %273 = vmatpush1.msra.mxu0 %v253
      %274 = vmatprep.subr.mxu0 0.0
      %275 = vmatpush1.msra.mxu0 %v254
      %276 = vmatprep.subr.mxu0 0.0
      %277 = vmatpush1.msra.mxu0 %v255
      %278 = vmatprep.subr.mxu0 0.0
      %279 = vmatpush1.msra.mxu0 %v256
      %280 = vmatprep.subr.mxu0 0.0
      %281 = vmatpush1.msra.mxu0 %v270
      %282 = vmatprep.subr.mxu0 0.0
      %283 = vmatpush1.msra.mxu0 0.0
      %284 = vmatprep.subr.mxu0 0.0
      %285 = vmatpush1.msra.mxu0 0.0
      %286 = vmatprep.subr.mxu0 0.0
      %287 = vmatpush1.msra.mxu0 0.0
      %288 = vmatprep.subr.mxu0 0.0
      %289 = vmatpush1.msra.mxu0 0.0
      %290 = vmatprep.subr.mxu0 0.0
      %291 = vmatpush1.msra.mxu0 0.0
      %292 = vmatprep.subr.mxu0 0.0
      %293 = vmatpush1.msra.mxu0 0.0
      %294 = vmatprep.subr.mxu0 0.0
      %295 = vmatpush1.msra.mxu0 0.0
      %296 = vmatprep.subr.mxu0 0.0
      %297 = vmatpush1.msra.mxu0 0.0
      %298 = vmatprep.subr.mxu0 0.0
      %299 = vmatpush1.msra.mxu0 0.0
      %300 = vmatprep.subr.mxu0 0.0
      %301 = vmatpush1.msra.mxu0 0.0
      %302 = vmatprep.subr.mxu0 0.0
      %303 = vmatpush1.msra.mxu0 0.0
      %304 = vmatprep.subr.mxu0 0.0
      %305 = vmatpush1.msra.mxu0 0.0
      %306 = vmatprep.subr.mxu0 0.0
      %307 = vmatpush1.msra.mxu0 0.0
      %308 = vmatprep.subr.mxu0 0.0
      %309 = vmatpush1.msra.mxu0 0.0
      %310 = vmatprep.subr.mxu0 0.0
      %311 = vmatpush1.msra.mxu0 0.0
      %312 = vmatprep.subr.mxu0 0.0
      %313 = vmatpush1.msra.mxu0 0.0
      %314 = vmatprep.subr.mxu0 0.0
      %315 = vmatpush1.msra.mxu0 0.0
      %316 = vmatprep.subr.mxu0 0.0
      %317 = vmatpush1.msra.mxu0 0.0
      %318 = vmatprep.subr.mxu0 0.0
      %319 = vmatpush1.msra.mxu0 0.0
      %320 = vmatprep.subr.mxu0 0.0
      %321 = vmatpush1.msra.mxu0 0.0
      %322 = vmatprep.subr.mxu0 0.0
      %323 = vmatpush1.msra.mxu0 0.0
      %324 = vmatprep.subr.mxu0 0.0
      %325 = vmatpush1.msra.mxu0 0.0
      %326 = vmatprep.subr.mxu0 0.0
      %327 = vmatpush1.msra.mxu0 0.0
      %328 = vmatprep.subr.mxu0 0.0
      %329 = vmatpush1.msra.mxu0 0.0
      %330 = vmatprep.subr.mxu0 0.0
      %331 = vmatpush1.msra.mxu0 0.0
      %332 = vmatprep.subr.mxu0 0.0
      %333 = vmatpush1.msra.mxu0 0.0
      %334 = vmatprep.subr.mxu0 0.0
      %335 = vmatpush1.msra.mxu0 0.0
      %336 = vmatprep.mubr.f32.mxu0 0.0
      %337 = vmatmul.mubr.f32.gmra.mrb[0].mxu0 %v266
      %v338 = vpop.f32.mrb[0].mxu0
      %v339 = vadd.f32 %v262, %v338
      %v340 = vpop.f32.mrb[0].mxu0
      %341 = vdwg.mxu0
      %v342 = vmax.f32 %v339, 0.0
      %vm343 = vcmask 523264
      %344 = vst.msk [vmem:[%s251] sm:$0xff] %vm343, %v342
      %p345 = scmp.lt.s32.totalorder %s19, 1
      %s346 = scalar_select %p345, %s19, 1
      %p347 = scmp.lt.s32.totalorder %s21, 0
      %s348 = scalar_select %p347, %s21, 0
      %p349 = scmp.lt.s32.totalorder %s20, 0
      %s350 = scalar_select %p349, %s20, 0
      %s351 = sadd.s32 %s350, %s348
      %s352 = sadd.s32 %s351, %s346
      %s353 = smul.addr %s352, 8
      %s354 = scalar_lea.vmem %s3, %s353
      // Predicated region
      $region33: #{conv_half_size_double_channels.1} parent=31 // pred_check
        %p355 = pneg %p135
      $region34: #{conv_half_size_double_channels.1} parent=31 // pred_check_branch
        %357 = sbr.rel (%p355) target = $region36
      $region35: #{conv_half_size_double_channels.1} parent=31 // pred_region
        _
      $region36: #{conv_half_size_double_channels.1} parent=31 // pred_fallthru
        _
    $region32: #{conv_half_size_double_channels.1} parent=5 // pred_fallthru
      _
    %p358 = scmp.le.s32.totalorder 2, %s9
    // Predicated region
    $region37: #{conv_half_size_double_channels.1} parent=5 // pred_check
      %p359 = pneg %p358
    $region38: #{conv_half_size_double_channels.1} parent=5 // pred_check_branch
      %361 = sbr.rel (%p359) target = $region40
    $region39: #{conv_half_size_double_channels.1} parent=5 // pred_region
      %s362 = ssub.s32 %s9, 2
      // Predicated region
      $region41: #{conv_half_size_double_channels.1} parent=39 // pred_check
        %p363 = pneg %p141
      $region42: #{conv_half_size_double_channels.1} parent=39 // pred_check_branch
        %365 = sbr.rel (%p363) target = $region44
      $region43: #{conv_half_size_double_channels.1} parent=39 // pred_region
        %p366 = scmp.lt.s32.totalorder %s22, 1
        %s367 = scalar_select %p366, %s22, 1
        %p368 = scmp.lt.s32.totalorder %s24, 0
        %s369 = scalar_select %p368, %s24, 0
        %p370 = scmp.lt.s32.totalorder %s23, 0
        %s371 = scalar_select %p370, %s23, 0
        %s372 = sadd.s32 %s371, %s369
        %s373 = sadd.s32 %s372, %s367
        %s374 = smul.addr %s373, 8
        %s375 = scalar_lea.vmem %s3, %s374
      $region44: #{conv_half_size_double_channels.1} parent=39 // pred_fallthru
        _
    $region40: #{conv_half_size_double_channels.1} parent=5 // pred_fallthru
      _
  $region6: #{conv_half_size_double_channels.1} parent=0 // loop_footer
    %s13 = sadd.s32 1, %s9
  $region7: #{conv_half_size_double_channels.1} parent=0 // loop_footer_branch
    %8 = sbr.rel target = $region3
  $region8: #{conv_half_size_double_channels.1} parent=0 // loop_exit
    _

</llo_original>
